<compile_context>
chip_gen: v6e
topology: v6e:2x2x1
jax: 0.10.0
libtpu: 0.0.40
codegen_flags: <defaults>
</compile_context>

<pallas_src>
import functools

import jax
import jax.numpy as jnp
from jax.experimental import pallas as pl
from jax.experimental.pallas import tpu as pltpu


# --------------------------------------------------------------------------- #
# Kernels
# --------------------------------------------------------------------------- #
def _sample_concrete_train_kernel(logits_ref, unif_ref, out_ref, *, inv_tau):
    """Gumbel-softmax relaxation.  logits [TB, D], uniform packed as [TB*K, D]."""
    tb, d = logits_ref.shape
    tbk = unif_ref.shape[0]
    k = tbk // tb                                   # static python int

    # Heavy EUP work (2 logs + 1 exp) stays on the fully-packed [TB*K, D] layout.
    u = unif_ref[...]                               # strictly in (0,1); u == 0
    gumbel = -jnp.log(-jnp.log(u))                  # degrades gracefully to -inf

    lg = logits_ref[...]                            # [TB, D]
    # Replicate logits once into the packed layout (row b*K + j <- logits[b]).
    lg_rep = jnp.broadcast_to(lg[:, None, :], (tb, k, d)).reshape(tbk, d)
    noisy = (gumbel + lg_rep) * inv_tau             # [TB*K, D]

    m = jnp.max(noisy, axis=-1, keepdims=True)      # [TB*K, 1]
    e = jnp.exp(noisy - m)
    denom = jnp.sum(e, axis=-1, keepdims=True)      # [TB*K, 1]
    soft = e * pl.reciprocal(denom, approx=True)    # softmax over D (EUP vrcp)

    # Reshape only here; max over the K samples -> [TB, D].
    out_ref[...] = jnp.max(soft.reshape(tb, k, d), axis=1)


def _sample_concrete_eval_kernel(logits_ref, out_ref, *, k):
    """Discrete top-k mask via rank-count (tie-aware, matches torch.topk + '>')."""
    lg = logits_ref[...]                            # [TB, D]
    # counts[b, d] = #{d' : lg[b, d'] >= lg[b, d]};  x > kth_largest <=> counts < k.
    # NOTE: O(D^2) intermediate [TB, D, D]; fine for L2X-scale D (few hundred).
    ge = (lg[:, :, None] >= lg[:, None, :]).astype(jnp.float32)   # [TB, D, D]
    counts = jnp.sum(ge, axis=1)                                  # [TB, D]
    out_ref[...] = (counts < k).astype(jnp.float32)


# --------------------------------------------------------------------------- #
# Wrapper
# --------------------------------------------------------------------------- #
def _pick_block_b(batch, bytes_per_batch_row, vmem_budget=8 << 20):
    """Largest power-of-two batch tile (multiple of 8) that divides B and whose
    double-buffered working set stays under ~8 MiB (safe even for v5e's 16 MiB
    scoped-VMEM default and v7x's 64 MiB physical VMEM)."""
    for tb in (512, 256, 128, 64, 32, 16, 8):
        if batch % tb == 0 and 2 * tb * bytes_per_batch_row <= vmem_budget:
            return tb
    return batch                                    # full-array block (always legal)


def sample_concrete(logits, uniform=None, *, tau, k, train_explainer, block_b=None):
    """logits: [B, 1, D]; uniform: [B, k, D] in (0,1) (only required when training).

    Returns [B, 1, D] float32 — the relaxed samples in train mode, the discrete
    top-k mask in eval mode (matching the PyTorch forward).
    """
    B, one, D = logits.shape
    assert one == 1
    assert 1 <= k <= D, "k must satisfy 1 <= k <= D"
    logits2d = logits.reshape(B, D).astype(jnp.float32)

    compiler_params = pltpu.CompilerParams(
        dimension_semantics=("parallel",))          # megacore sharding on v7x

    if train_explainer:
        assert uniform is not None and uniform.shape == (B, k, D)
        # Pack B*K onto the sublane axis (contiguous reshape, zero cost in HBM).
        uniform2d = uniform.reshape(B * k, D).astype(jnp.float32)
        if block_b is None:
            block_b = _pick_block_b(B, (k * D + 2 * D) * 4)
        assert B % block_b == 0
        out2d = pl.pallas_call(
            functools.partial(_sample_concrete_train_kernel,
                              inv_tau=1.0 / float(tau)),
            out_shape=jax.ShapeDtypeStruct((B, D), jnp.float32),
            grid=(B // block_b,),
            in_specs=[pl.BlockSpec((block_b, D), lambda i: (i, 0)),
                      pl.BlockSpec((block_b * k, D), lambda i: (i, 0))],
            out_specs=pl.BlockSpec((block_b, D), lambda i: (i, 0)),
            compiler_params=compiler_params,
        )(logits2d, uniform2d)
    else:
        # Eval mode: `uniform` is never touched — no HBM read, no gumbel/softmax.
        if block_b is None:
            block_b = _pick_block_b(B, (2 * D + D * D) * 4)
        assert B % block_b == 0
        out2d = pl.pallas_call(
            functools.partial(_sample_concrete_eval_kernel, k=k),
            out_shape=jax.ShapeDtypeStruct((B, D), jnp.float32),
            grid=(B // block_b,),
            in_specs=[pl.BlockSpec((block_b, D), lambda i: (i, 0))],
            out_specs=pl.BlockSpec((block_b, D), lambda i: (i, 0)),
            compiler_params=compiler_params,
        )(logits2d)

    return out2d[:, None, :]                        # unsqueeze(-2) -> [B, 1, D]


# --------------------------------------------------------------------------- #
# Pure-JAX reference + self-test
# --------------------------------------------------------------------------- #
def _reference(logits, uniform, *, tau, k, train_explainer):
    B, _, D = logits.shape
    if train_explainer:
        gumbel = -jnp.log(-jnp.log(uniform))
        noisy = (gumbel + logits) / tau                       # [B, K, D]
        soft = jax.nn.softmax(noisy, axis=-1)
        out = jnp.max(soft, axis=1)                           # [B, D]
    else:
        lg = logits.reshape(B, D)
        kth = jnp.sort(lg, axis=-1)[:, -k][:, None]           # k-th largest
        out = (lg > kth).astype(jnp.float32)
    return out[:, None, :]


if __name__ == "__main__":
    B, K, D = 16, 4, 128
    tau = 0.5

    key = jax.random.PRNGKey(0)
    k_logits, k_unif = jax.random.split(key)
    logits = jax.random.normal(k_logits, (B, 1, D), dtype=jnp.float32)
    # Deterministic stand-in for torch.rand(); kept strictly inside (0, 1).
    # TODO(synk): optionally generate the noise on-chip with pltpu.prng_* to avoid
    # the HBM read entirely (torch.rand parity would then be lost).
    uniform = jax.random.uniform(k_unif, (B, K, D), dtype=jnp.float32,
                                 minval=1e-6, maxval=1.0 - 1e-6)

    # block_b=8 -> grid=(2,) to exercise the batch pipeline / megacore path.
    out_train = sample_concrete(logits, uniform, tau=tau, k=K,
                                train_explainer=True, block_b=8)
    out_eval = sample_concrete(logits, tau=tau, k=K,
                               train_explainer=False, block_b=8)
    jax.block_until_ready(out_train)
    jax.block_until_ready(out_eval)

    ref_train = _reference(logits, uniform, tau=tau, k=K, train_explainer=True)
    ref_eval = _reference(logits, None, tau=tau, k=K, train_explainer=False)

    assert out_train.shape == (B, 1, D) and out_eval.shape == (B, 1, D)
    # Train path uses the approx EUP reciprocal for the softmax denominator,
    # so compare with a slightly relaxed tolerance; eval path is exact 0/1.
    assert jnp.allclose(out_train, ref_train, atol=2e-3, rtol=2e-3)
    assert jnp.array_equal(out_eval, ref_eval)

    print("KERNEL_OK")
</pallas_src>

<mosaic_0001>
module attributes {stable_mosaic.version = 11 : i64} {
  func.func @_sample_concrete_train_kernel(%arg0: i32, %arg1: memref<8x128xf32, #tpu.memory_space<vmem>>, %arg2: memref<32x128xf32, #tpu.memory_space<vmem>>, %arg3: memref<8x128xf32, #tpu.memory_space<vmem>>) attributes {dimension_semantics = [#tpu.dimension_semantics<parallel>], iteration_bounds = array<i64: 2>, scalar_prefetch = 0 : i64, scratch_operands = 0 : i64, tpu.core_type = #tpu.core_type<tc>, window_params = [{transform_indices = @transform_0, window_bounds = array<i64: 8, 128>}, {transform_indices = @transform_1, window_bounds = array<i64: 32, 128>}, {transform_indices = @transform_2, window_bounds = array<i64: 8, 128>}]} {
    %c0 = arith.constant 0 : index
    %c0_0 = arith.constant 0 : index
    %0 = vector.load %arg2[%c0, %c0_0] : memref<32x128xf32, #tpu.memory_space<vmem>>, vector<32x128xf32>
    %1 = math.log %0 : vector<32x128xf32>
    %cst = arith.constant 0.000000e+00 : f32
    %2 = vector.broadcast %cst : f32 to vector<32x128xf32>
    %3 = arith.subf %2, %1 : vector<32x128xf32>
    %4 = math.log %3 : vector<32x128xf32>
    %cst_1 = arith.constant 0.000000e+00 : f32
    %5 = vector.broadcast %cst_1 : f32 to vector<32x128xf32>
    %6 = arith.subf %5, %4 : vector<32x128xf32>
    %c0_2 = arith.constant 0 : index
    %c0_3 = arith.constant 0 : index
    %7 = vector.load %arg1[%c0_2, %c0_3] : memref<8x128xf32, #tpu.memory_space<vmem>>, vector<8x128xf32>
    %8 = vector.shape_cast %7 : vector<8x128xf32> to vector<8x1x128xf32>
    %9 = vector.shape_cast %8 : vector<8x1x128xf32> to vector<8x1x128xf32>
    %10 = vector.broadcast %9 : vector<8x1x128xf32> to vector<8x4x128xf32>
    %11 = vector.shape_cast %10 : vector<8x4x128xf32> to vector<32x128xf32>
    %12 = arith.addf %6, %11 : vector<32x128xf32>
    %cst_4 = arith.constant 2.000000e+00 : f32
    %13 = vector.broadcast %cst_4 : f32 to vector<32x128xf32>
    %14 = arith.mulf %12, %13 : vector<32x128xf32>
    %cst_5 = arith.constant dense<0xFF800000> : vector<32xf32>
    %15 = vector.multi_reduction <maximumf>, %14, %cst_5 [1] : vector<32x128xf32> to vector<32xf32>
    %16 = vector.shape_cast %15 : vector<32xf32> to vector<32x1xf32>
    %17 = vector.broadcast %16 : vector<32x1xf32> to vector<32x128xf32>
    %18 = arith.subf %14, %17 : vector<32x128xf32>
    %19 = math.exp %18 : vector<32x128xf32>
    %cst_6 = arith.constant dense<0.000000e+00> : vector<32xf32>
    %20 = vector.multi_reduction <add>, %19, %cst_6 [1] : vector<32x128xf32> to vector<32xf32>
    %21 = vector.shape_cast %20 : vector<32xf32> to vector<32x1xf32>
    %22 = tpu.reciprocal %21 {approx = true} : vector<32x1xf32> -> vector<32x1xf32>
    %23 = vector.broadcast %22 : vector<32x1xf32> to vector<32x128xf32>
    %24 = arith.mulf %19, %23 : vector<32x128xf32>
    %25 = vector.shape_cast %24 : vector<32x128xf32> to vector<8x4x128xf32>
    %cst_7 = arith.constant dense<0xFF800000> : vector<8x128xf32>
    %26 = vector.multi_reduction <maximumf>, %25, %cst_7 [1] : vector<8x4x128xf32> to vector<8x128xf32>
    %c0_8 = arith.constant 0 : index
    %c0_9 = arith.constant 0 : index
    %27 = vector.load %arg3[%c0_8, %c0_9] : memref<8x128xf32, #tpu.memory_space<vmem>>, vector<8x128xf32>
    tpu.vector_store %arg3[%c0_8, %c0_9], %26 {strides = array<i32>} : memref<8x128xf32, #tpu.memory_space<vmem>>, vector<8x128xf32>,
    return
  }
  func.func @transform_0(%arg0: i32) -> (i32, i32) {
    %c0_i32 = arith.constant 0 : i32
    %c0_i32_0 = arith.constant 0 : i32
    return %arg0, %c0_i32 : i32, i32
  }
  func.func @transform_1(%arg0: i32) -> (i32, i32) {
    %c0_i32 = arith.constant 0 : i32
    %c0_i32_0 = arith.constant 0 : i32
    return %arg0, %c0_i32 : i32, i32
  }
  func.func @transform_2(%arg0: i32) -> (i32, i32) {
    %c0_i32 = arith.constant 0 : i32
    %c0_i32_0 = arith.constant 0 : i32
    return %arg0, %c0_i32 : i32, i32
  }
}

</mosaic_0001>

<llo_original>
// kernel: tpu_custom_call.1
$region0: #{tpu_custom_call.1}
  #allocation0 [shape = 'u32[]', space=smem, size = 0x4, offset = 0x4, fixed_abs, tag = 'smem constant byte address 0x4 - core index']
  #allocation1 [shape = 'u32[144,128]{1,0:T(1,128)}', space=vmem, size = 0x12000, scoped, tag = 'internal scratch']
  %s0 = inlined_call_operand.hbm [shape: f32[16,128], index: 0, kind: input, shape index: {}]
  %s1 = inlined_call_operand.hbm [shape: f32[64,128], index: 1, kind: input, shape index: {}]
  %s2 = inlined_call_operand.hbm [shape: f32[16,128], index: 2, kind: output, shape index: {}]
  %s3 = sld [smem:[#allocation0]]
  $region49: #{tpu_custom_call.1} parent=0
    _
  %s5 = ssub.s32 1, %s3
  %s6 = scalar_select 0, %s5, %s3
  $region1: #{tpu_custom_call.1} parent=0
    #allocation2 [shape = 'u8[8192]{0}', space=vmem, size = 0x2000, scoped, tag = 'input window, operand 0']
    #allocation3 [shape = 's32[2]{0}', space=sflag, size = 0x8, scoped, tag = 'scoped memory for tpu_custom_call.1']
    #allocation4 [shape = 's32[2]{0}', space=sflag, size = 0x8, scoped, tag = 'scoped memory for tpu_custom_call.1']
    #allocation5 [shape = 'u8[32768]{0}', space=vmem, size = 0x8000, scoped, tag = 'input window, operand 1']
    #allocation6 [shape = 's32[2]{0}', space=sflag, size = 0x8, scoped, tag = 'scoped memory for tpu_custom_call.1']
    #allocation7 [shape = 'u8[8192]{0}', space=vmem, size = 0x2000, scoped, tag = 'output window, operand 0']
    %7 = vsyncpa [#allocation3], 0
    %s8 = scalar_lea.sflag [#allocation3], 1
    %9 = vsyncpa %s8, 0
    %10 = vsyncpa [#allocation6], 0
    %s11 = scalar_lea.sflag [#allocation6], 1
    %12 = vsyncpa %s11, 0
    %13 = vsyncpa [#allocation4], 0
    %s14 = scalar_lea.sflag [#allocation4], 1
    %15 = vsyncpa %s14, 0
    loop: start=0, step=1, limit=4
    $region2: #{tpu_custom_call.1} parent=1 // loop_pre_header
      _
    $region3: #{tpu_custom_call.1} parent=1 // loop_header
      %s17 = sphi 0, %s21
      %p18 = scmp.ge.s32.totalorder %s17, 4
      %s27 = sphi 0, %s29
      %s30 = sphi 0, %s27
      %s31 = sphi 0, %s30
      %s47 = sphi 0, %s31
      %s53 = sphi 0, %s55
      %s56 = sphi 0, %s53
      %s57 = sphi 0, %s56
      %s73 = sphi 0, %s57
      %s79 = sphi 0, %s81
      %s82 = sphi 0, %s79
      %s83 = sphi 0, %s82
      %s99 = sphi 0, %s83
    $region4: #{tpu_custom_call.1} parent=1 // loop_header_branch
      %20 = sbr.rel (%p18) target = $region8
    $region5: #{tpu_custom_call.1} parent=1 // loop_body
      %s22 = ssub.s32 %s17, 1
      %s23 = ssub.s32 %s17, 2
      %s24 = sadd.s32 %s17, 1
      %s25 = ssub.s32 %s17, %s24
      %p26 = scmp.eq.s32.totalorder %s25, 0
      %s28 = sadd.s32 %s27, 1
      %s29 = scalar_select %p26, %s27, %s28
      %p32 = pneg %p26
      %p33 = scmp.eq.s32.totalorder %s17, 1
      %p34 = por %p32, %p33
      %p35 = scmp.ne.s32.totalorder %s27, %s30
      %p36 = scmp.eq.s32.totalorder %s17, 0
      %p37 = por %p35, %p36
      %p38 = scmp.ne.s32.totalorder %s27, %s30
      %p39 = scmp.eq.s32.totalorder %s22, 1
      %p40 = por %p38, %p39
      %p41 = scmp.ne.s32.totalorder %s30, %s31
      %p42 = scmp.eq.s32.totalorder %s22, 0
      %p43 = por %p41, %p42
      %p44 = scmp.ne.s32.totalorder %s30, %s31
      %p45 = scmp.eq.s32.totalorder %s23, 1
      %p46 = por %p44, %p45
      %p48 = scmp.ne.s32.totalorder %s31, %s47
      %p49 = scmp.eq.s32.totalorder %s23, 0
      %p50 = por %p48, %p49
      %s51 = ssub.s32 %s17, %s24
      %p52 = scmp.eq.s32.totalorder %s51, 0
      %s54 = sadd.s32 %s53, 1
      %s55 = scalar_select %p52, %s53, %s54
      %p58 = pneg %p52
      %p59 = scmp.eq.s32.totalorder %s17, 1
      %p60 = por %p58, %p59
      %p61 = scmp.ne.s32.totalorder %s53, %s56
      %p62 = scmp.eq.s32.totalorder %s17, 0
      %p63 = por %p61, %p62
      %p64 = scmp.ne.s32.totalorder %s53, %s56
      %p65 = scmp.eq.s32.totalorder %s22, 1
      %p66 = por %p64, %p65
      %p67 = scmp.ne.s32.totalorder %s56, %s57
      %p68 = scmp.eq.s32.totalorder %s22, 0
      %p69 = por %p67, %p68
      %p70 = scmp.ne.s32.totalorder %s56, %s57
      %p71 = scmp.eq.s32.totalorder %s23, 1
      %p72 = por %p70, %p71
      %p74 = scmp.ne.s32.totalorder %s57, %s73
      %p75 = scmp.eq.s32.totalorder %s23, 0
      %p76 = por %p74, %p75
      %s77 = ssub.s32 %s17, %s24
      %p78 = scmp.eq.s32.totalorder %s77, 0
      %s80 = sadd.s32 %s79, 1
      %s81 = scalar_select %p78, %s79, %s80
      %p84 = pneg %p78
      %p85 = scmp.eq.s32.totalorder %s17, 1
      %p86 = por %p84, %p85
      %p87 = scmp.ne.s32.totalorder %s79, %s82
      %p88 = scmp.eq.s32.totalorder %s17, 0
      %p89 = por %p87, %p88
      %p90 = scmp.ne.s32.totalorder %s79, %s82
      %p91 = scmp.eq.s32.totalorder %s22, 1
      %p92 = por %p90, %p91
      %p93 = scmp.ne.s32.totalorder %s82, %s83
      %p94 = scmp.eq.s32.totalorder %s22, 0
      %p95 = por %p93, %p94
      %p96 = scmp.ne.s32.totalorder %s82, %s83
      %p97 = scmp.eq.s32.totalorder %s23, 1
      %p98 = por %p96, %p97
      %p100 = scmp.ne.s32.totalorder %s83, %s99
      %p101 = scmp.eq.s32.totalorder %s23, 0
      %p102 = por %p100, %p101
      %p103 = scmp.le.s32.totalorder 1, %s17
      %p104 = scmp.lt.s32.totalorder %s17, 3
      %p105 = pnand %p103, %p104
      %p106 = pneg %p105
      // Predicated region
      $region9: #{tpu_custom_call.1} parent=5 // pred_check
        _
      $region10: #{tpu_custom_call.1} parent=5 // pred_check_branch
        %108 = sbr.rel (%p105) target = $region12
      $region11: #{tpu_custom_call.1} parent=5 // pred_region
        %s109 = ssub.s32 %s17, 1
      $region12: #{tpu_custom_call.1} parent=5 // pred_fallthru
        _
      %p110 = scmp.lt.s32.totalorder %s17, 2
      // Predicated region
      $region13: #{tpu_custom_call.1} parent=5 // pred_check
        %p111 = pneg %p110
      $region14: #{tpu_custom_call.1} parent=5 // pred_check_branch
        %113 = sbr.rel (%p111) target = $region16
      $region15: #{tpu_custom_call.1} parent=5 // pred_region
        // Predicated region
        $region17: #{tpu_custom_call.1} parent=15 // pred_check
          %p114 = pneg %p37
        $region18: #{tpu_custom_call.1} parent=15 // pred_check_branch
          %116 = sbr.rel (%p114) target = $region20
        $region19: #{tpu_custom_call.1} parent=15 // pred_region
          %s117 = sand.u32 %s27, 1
          %s118 = scalar_lea.sflag [#allocation3], %s117
          %s119 = sand.u32 %s27, 1
          %s120 = smul.addr %s119, 8
          %s121 = scalar_lea.vmem [#allocation2], %s120
          %s123 = ssub.s32 128, 128
          %124 = vsyncadd %s118, %s123
          %s125 = smul.addr %s17, 128
          %s126 = scalar_lea.hbm %s0, %s125
          %s128 = sshll.u32 %s121, 4
          %s129 = int_to_ptr.vmem [resolvable:$true] %s128
          %131 = dma.hbm_to_vmem [thread:$0]  %s126, 128, %s129, %s118
        $region20: #{tpu_custom_call.1} parent=15 // pred_fallthru
          _
        // Predicated region
        $region21: #{tpu_custom_call.1} parent=15 // pred_check
          %p132 = pneg %p63
        $region22: #{tpu_custom_call.1} parent=15 // pred_check_branch
          %134 = sbr.rel (%p132) target = $region24
        $region23: #{tpu_custom_call.1} parent=15 // pred_region
          %s135 = sand.u32 %s53, 1
          %s136 = scalar_lea.sflag [#allocation6], %s135
          %s137 = sand.u32 %s53, 1
          %s138 = smul.addr %s137, 32
          %s139 = scalar_lea.vmem [#allocation5], %s138
          %s140 = smul.u32 4, %s17
          %s142 = ssub.s32 512, 512
          %143 = vsyncadd %s136, %s142
          %s144 = smul.addr %s140, 128
          %s145 = scalar_lea.hbm %s1, %s144
          %s146 = sshll.u32 %s139, 4
          %s147 = int_to_ptr.vmem [resolvable:$true] %s146
          %152 = dma.hbm_to_vmem [thread:$0]  %s145, 512, %s147, %s136, 128, 128, 8
        $region24: #{tpu_custom_call.1} parent=15 // pred_fallthru
          _
      $region16: #{tpu_custom_call.1} parent=5 // pred_fallthru
        _
      %p153 = scmp.le.s32.totalorder 1, %s17
      %p154 = scmp.lt.s32.totalorder %s17, 3
      %p155 = pnand %p153, %p154
      %p156 = pneg %p155
      // Predicated region
      $region25: #{tpu_custom_call.1} parent=5 // pred_check
        _
      $region26: #{tpu_custom_call.1} parent=5 // pred_check_branch
        %158 = sbr.rel (%p155) target = $region28
      $region27: #{tpu_custom_call.1} parent=5 // pred_region
        %s159 = ssub.s32 %s17, 1
        %s160 = sand.u32 %s30, 1
        %s161 = scalar_lea.sflag [#allocation3], %s160
        %s162 = sand.u32 %s30, 1
        %s163 = smul.addr %s162, 8
        %s164 = scalar_lea.vmem [#allocation2], %s163
        // Predicated region
        $region29: #{tpu_custom_call.1} parent=27 // pred_check
          %p165 = pneg %p43
        $region30: #{tpu_custom_call.1} parent=27 // pred_check_branch
          %167 = sbr.rel (%p165) target = $region32
        $region31: #{tpu_custom_call.1} parent=27 // pred_region
          %168 = dma.done %s161, 128
        $region32: #{tpu_custom_call.1} parent=27 // pred_fallthru
          _
        %s169 = sand.u32 %s56, 1
        %s170 = scalar_lea.sflag [#allocation6], %s169
        %s171 = sand.u32 %s56, 1
        %s172 = smul.addr %s171, 32
        %s173 = scalar_lea.vmem [#allocation5], %s172
        // Predicated region
        $region33: #{tpu_custom_call.1} parent=27 // pred_check
          %p174 = pneg %p69
        $region34: #{tpu_custom_call.1} parent=27 // pred_check_branch
          %176 = sbr.rel (%p174) target = $region36
        $region35: #{tpu_custom_call.1} parent=27 // pred_region
          %177 = dma.done %s170, 512
        $region36: #{tpu_custom_call.1} parent=27 // pred_fallthru
          _
        %s178 = sand.u32 %s30, 1
        %s179 = scalar_lea.sflag [#allocation3], %s178
        %s180 = sand.u32 %s30, 1
        %s181 = smul.addr %s180, 8
        %s182 = scalar_lea.vmem [#allocation2], %s181
        %p183 = pneg %p43
        %p184 = pneg %p40
        %s185 = sand.u32 %s56, 1
        %s186 = scalar_lea.sflag [#allocation6], %s185
        %s187 = sand.u32 %s56, 1
        %s188 = smul.addr %s187, 32
        %s189 = scalar_lea.vmem [#allocation5], %s188
        %p190 = pneg %p69
        %p191 = pneg %p66
        %p192 = pneg %p95
        %p193 = pneg %p92
        %s194 = sand.u32 %s82, 1
        %s195 = scalar_lea.sflag [#allocation4], %s194
        %s196 = sand.u32 %s82, 1
        %s197 = smul.addr %s196, 8
        %s198 = scalar_lea.vmem [#allocation7], %s197
        %s199 = smul.u32 4, %s22
        %v200 = vld [vmem:[%s173] sm:$0xff]
        %v201 = vld [vmem:[%s173 + $0x8] sm:$0xff]
        %v202 = vld [vmem:[%s173 + $0x10] sm:$0xff]
        %v203 = vld [vmem:[%s173 + $0x18] sm:$0xff]
        %v204 = vlog2.pop %v200
        %v205 = vmul.f32 %v204, 0.6931472
        %v206 = vlog2.pop %v201
        %v207 = vmul.f32 %v206, 0.6931472
        %v208 = vlog2.pop %v202
        %v209 = vmul.f32 %v208, 0.6931472
        %v210 = vlog2.pop %v203
        %v211 = vmul.f32 %v210, 0.6931472
        %v212 = vsub.f32 0.0, %v205
        %v213 = vsub.f32 0.0, %v207
        %v214 = vsub.f32 0.0, %v209
        %v215 = vsub.f32 0.0, %v211
        %v216 = vlog2.pop %v212
        %v217 = vmul.f32 %v216, 0.6931472
        %v218 = vlog2.pop %v213
        %v219 = vmul.f32 %v218, 0.6931472
        %v220 = vlog2.pop %v214
        %v221 = vmul.f32 %v220, 0.6931472
        %v222 = vlog2.pop %v215
        %v223 = vmul.f32 %v222, 0.6931472
        %v224 = vsub.f32 0.0, %v217
        %v225 = vsub.f32 0.0, %v219
        %v226 = vsub.f32 0.0, %v221
        %v227 = vsub.f32 0.0, %v223
        %v228 = vld [vmem:[%s164] sm:$0xff]
        %v230 = vcombine.high %v228, %v228
        %v232 = vunpack.c.l.s4 1966171168
        %v233 = vunpack.c.0.s8 %v232
        %v234 = vlaneseq
        %v235 = vshrl.u32 %v234, 7
        %v236 = vsub.s32 %v233, %v235
        %v237 = vrot.slane %v228, %v236
        %v239 = vunpack.c.l.s4 1966171168
        %v240 = vunpack.c.0.s8 %v239
        %v241 = vlaneseq
        %v242 = vshrl.u32 %v241, 7
        %v243 = vsub.s32 %v240, %v242
        %v244 = vrot.slane %v230, %v243
        %v245 = vcombine.high %v237, %v237
        %v246 = vcombine.high %v244, %v244
        %v248 = vunpack.c.l.s4 1966171168
        %v249 = vunpack.c.0.s8 %v248
        %v250 = vlaneseq
        %v251 = vshrl.u32 %v250, 7
        %v252 = vsub.s32 %v249, %v251
        %v253 = vrot.slane %v237, %v252
        %v255 = vunpack.c.l.s4 1966171168
        %v256 = vunpack.c.0.s8 %v255
        %v257 = vlaneseq
        %v258 = vshrl.u32 %v257, 7
        %v259 = vsub.s32 %v256, %v258
        %v260 = vrot.slane %v244, %v259
        %v262 = vunpack.c.l.s4 1966171168
        %v263 = vunpack.c.0.s8 %v262
        %v264 = vlaneseq
        %v265 = vshrl.u32 %v264, 7
        %v266 = vsub.s32 %v263, %v265
        %v267 = vrot.slane %v245, %v266
        %v269 = vunpack.c.l.s4 1966171168
        %v270 = vunpack.c.0.s8 %v269
        %v271 = vlaneseq
        %v272 = vshrl.u32 %v271, 7
        %v273 = vsub.s32 %v270, %v272
        %v274 = vrot.slane %v246, %v273
        %v275 = vcombine.high %v253, %v253
        %v276 = vcombine.high %v260, %v260
        %v277 = vcombine.high %v267, %v267
        %v278 = vcombine.high %v274, %v274
        %v279 = vlaneseq
        %v280 = vshrl.u32 %v279, 7
        %v281 = vsub.s32 0, %v280
        %v282 = vrot.slane %v253, %v281
        %v283 = vlaneseq
        %v284 = vshrl.u32 %v283, 7
        %v285 = vsub.s32 0, %v284
        %v286 = vrot.slane %v267, %v285
        %v287 = vlaneseq
        %v288 = vshrl.u32 %v287, 7
        %v289 = vsub.s32 0, %v288
        %v290 = vrot.slane %v275, %v289
        %v291 = vlaneseq
        %v292 = vshrl.u32 %v291, 7
        %v293 = vsub.s32 0, %v292
        %v294 = vrot.slane %v277, %v293
        %v295 = vlaneseq
        %v296 = vshrl.u32 %v295, 7
        %v297 = vsub.s32 0, %v296
        %v298 = vrot.slane %v260, %v297
        %v299 = vlaneseq
        %v300 = vshrl.u32 %v299, 7
        %v301 = vsub.s32 0, %v300
        %v302 = vrot.slane %v274, %v301
        %v303 = vlaneseq
        %v304 = vshrl.u32 %v303, 7
        %v305 = vsub.s32 0, %v304
        %v306 = vrot.slane %v276, %v305
        %v307 = vlaneseq
        %v308 = vshrl.u32 %v307, 7
        %v309 = vsub.s32 0, %v308
        %v310 = vrot.slane %v278, %v309
        %v311 = vcombine.low %v282, %v286
        %v312 = vcombine.low %v290, %v294
        %v313 = vcombine.low %v298, %v302
        %v314 = vcombine.low %v306, %v310
        %v319 = vadd.f32 %v224, %v311
        %v320 = vadd.f32 %v225, %v312
        %v321 = vadd.f32 %v226, %v313
        %v322 = vadd.f32 %v227, %v314
        %v323 = vmul.f32 %v319, 2.0
        %v324 = vmul.f32 %v320, 2.0
        %v325 = vmul.f32 %v321, 2.0
        %v326 = vmul.f32 %v322, 2.0
        %327 = vmax.xlane.f32.xlu0 %v323
        %v328 = vpop.xlane.xlu0 %327
        %329 = vmax.xlane.f32.xlu0 %v324
        %v330 = vpop.xlane.xlu0 %329
        %331 = vmax.xlane.f32.xlu0 %v325
        %v332 = vpop.xlane.xlu0 %331
        %333 = vmax.xlane.f32.xlu0 %v326
        %v334 = vpop.xlane.xlu0 %333
        %v335 = vsub.f32 %v323, %v328
        %v336 = vsub.f32 %v324, %v330
        %v337 = vsub.f32 %v325, %v332
        %v338 = vsub.f32 %v326, %v334
        %v339 = vmul.f32 %v335, 1.442695
        %v340 = vpow.pop %v339
        %v341 = vmul.f32 %v336, 1.442695
        %v342 = vpow.pop %v341
        %v343 = vmul.f32 %v337, 1.442695
        %v344 = vpow.pop %v343
        %v345 = vmul.f32 %v338, 1.442695
        %v346 = vpow.pop %v345
        %347 = vadd.xlane.f32.xlu0 %v340
        %v348 = vpop.xlane.xlu0 %347
        %349 = vadd.xlane.f32.xlu0 %v342
        %v350 = vpop.xlane.xlu0 %349
        %351 = vadd.xlane.f32.xlu0 %v344
        %v352 = vpop.xlane.xlu0 %351
        %353 = vadd.xlane.f32.xlu0 %v346
        %v354 = vpop.xlane.xlu0 %353
        %v355 = vrcp.pop %v348
        %v356 = vrcp.pop %v350
        %v357 = vrcp.pop %v352
        %v358 = vrcp.pop %v354
        %v359 = vmul.f32 %v340, %v355
        %v360 = vmul.f32 %v342, %v356
        %v361 = vmul.f32 %v344, %v357
        %v362 = vmul.f32 %v346, %v358
        %v367 = vcombine.high %v359, %v359
        %v368 = vcombine.high %v360, %v360
        %v369 = vcombine.high %v361, %v361
        %v370 = vcombine.high %v362, %v362
        %vm375 = vcmask 1043456
        %v376 = vsel %vm375, %v359, -inf
        %v377 = vrot.slane %v376, 4
        %v378 = vmax.f32 %v376, %v377
        %v379 = vrot.slane %v378, 2
        %v380 = vmax.f32 %v378, %v379
        %v381 = vrot.slane %v380, 1
        %v382 = vmax.f32 %v380, %v381
        %v383 = vsel %vm375, %v367, -inf
        %v384 = vrot.slane %v383, 4
        %v385 = vmax.f32 %v383, %v384
        %v386 = vrot.slane %v385, 2
        %v387 = vmax.f32 %v385, %v386
        %v388 = vrot.slane %v387, 1
        %v389 = vmax.f32 %v387, %v388
        %v390 = vsel %vm375, %v360, -inf
        %v391 = vrot.slane %v390, 4
        %v392 = vmax.f32 %v390, %v391
        %v393 = vrot.slane %v392, 2
        %v394 = vmax.f32 %v392, %v393
        %v395 = vrot.slane %v394, 1
        %v396 = vmax.f32 %v394, %v395
        %v397 = vsel %vm375, %v368, -inf
        %v398 = vrot.slane %v397, 4
        %v399 = vmax.f32 %v397, %v398
        %v400 = vrot.slane %v399, 2
        %v401 = vmax.f32 %v399, %v400
        %v402 = vrot.slane %v401, 1
        %v403 = vmax.f32 %v401, %v402
        %v404 = vsel %vm375, %v361, -inf
        %v405 = vrot.slane %v404, 4
        %v406 = vmax.f32 %v404, %v405
        %v407 = vrot.slane %v406, 2
        %v408 = vmax.f32 %v406, %v407
        %v409 = vrot.slane %v408, 1
        %v410 = vmax.f32 %v408, %v409
        %v411 = vsel %vm375, %v369, -inf
        %v412 = vrot.slane %v411, 4
        %v413 = vmax.f32 %v411, %v412
        %v414 = vrot.slane %v413, 2
        %v415 = vmax.f32 %v413, %v414
        %v416 = vrot.slane %v415, 1
        %v417 = vmax.f32 %v415, %v416
        %v418 = vsel %vm375, %v362, -inf
        %v419 = vrot.slane %v418, 4
        %v420 = vmax.f32 %v418, %v419
        %v421 = vrot.slane %v420, 2
        %v422 = vmax.f32 %v420, %v421
        %v423 = vrot.slane %v422, 1
        %v424 = vmax.f32 %v422, %v423
        %v425 = vsel %vm375, %v370, -inf
        %v426 = vrot.slane %v425, 4
        %v427 = vmax.f32 %v425, %v426
        %v428 = vrot.slane %v427, 2
        %v429 = vmax.f32 %v427, %v428
        %v430 = vrot.slane %v429, 1
        %v431 = vmax.f32 %v429, %v430
        %vm440 = vcmask 1041409
        %v441 = vsel %vm440, %v389, %v382
        %vm442 = vcmask 1042434
        %v443 = vsel %vm442, %v396, %v441
        %vm444 = vcmask 1043459
        %v445 = vsel %vm444, %v403, %v443
        %vm446 = vcmask 1044484
        %v447 = vsel %vm446, %v410, %v445
        %vm448 = vcmask 1045509
        %v449 = vsel %vm448, %v417, %v447
        %vm450 = vcmask 1046534
        %v451 = vsel %vm450, %v424, %v449
        %vm452 = vcmask 1047559
        %v453 = vsel %vm452, %v431, %v451
        %455 = vst [vmem:[%s198] sm:$0xff] %v453
        %s456 = sand.u32 %s82, 1
        %s457 = scalar_lea.sflag [#allocation4], %s456
        %s458 = sand.u32 %s82, 1
        %s459 = smul.addr %s458, 8
        %s460 = scalar_lea.vmem [#allocation7], %s459
        // Predicated region
        $region37: #{tpu_custom_call.1} parent=27 // pred_check
          %p461 = pneg %p92
        $region38: #{tpu_custom_call.1} parent=27 // pred_check_branch
          %463 = sbr.rel (%p461) target = $region40
        $region39: #{tpu_custom_call.1} parent=27 // pred_region
          %s465 = ssub.s32 128, 128
          %466 = vsyncadd %s457, %s465
          %s467 = smul.addr %s22, 128
          %s468 = scalar_lea.hbm %s2, %s467
          %s470 = sshll.u32 %s460, 4
          %s471 = int_to_ptr.vmem [resolvable:$true] %s470
          %473 = dma.vmem_to_hbm [thread:$0]  %s471, 128, %s468, %s457
        $region40: #{tpu_custom_call.1} parent=27 // pred_fallthru
          _
      $region28: #{tpu_custom_call.1} parent=5 // pred_fallthru
        _
      %p474 = scmp.le.s32.totalorder 2, %s17
      // Predicated region
      $region41: #{tpu_custom_call.1} parent=5 // pred_check
        %p475 = pneg %p474
      $region42: #{tpu_custom_call.1} parent=5 // pred_check_branch
        %477 = sbr.rel (%p475) target = $region44
      $region43: #{tpu_custom_call.1} parent=5 // pred_region
        %s478 = ssub.s32 %s17, 2
        // Predicated region
        $region45: #{tpu_custom_call.1} parent=43 // pred_check
          %p479 = pneg %p98
        $region46: #{tpu_custom_call.1} parent=43 // pred_check_branch
          %481 = sbr.rel (%p479) target = $region48
        $region47: #{tpu_custom_call.1} parent=43 // pred_region
          %s482 = sand.u32 %s83, 1
          %s483 = scalar_lea.sflag [#allocation4], %s482
          %s484 = sand.u32 %s83, 1
          %s485 = smul.addr %s484, 8
          %s486 = scalar_lea.vmem [#allocation7], %s485
          %487 = dma.done %s483, 128
        $region48: #{tpu_custom_call.1} parent=43 // pred_fallthru
          _
      $region44: #{tpu_custom_call.1} parent=5 // pred_fallthru
        _
    $region6: #{tpu_custom_call.1} parent=1 // loop_footer
      %s21 = sadd.s32 1, %s17
    $region7: #{tpu_custom_call.1} parent=1 // loop_footer_branch
      %16 = sbr.rel target = $region3
    $region8: #{tpu_custom_call.1} parent=1 // loop_exit
      _
    %488 = vsyncpa [#allocation3], 1
    %s489 = scalar_lea.sflag [#allocation3], 1
    %490 = vsyncpa %s489, 1
    %491 = vsyncpa [#allocation6], 1
    %s492 = scalar_lea.sflag [#allocation6], 1
    %493 = vsyncpa %s492, 1
    %494 = vsyncpa [#allocation4], 1
    %s495 = scalar_lea.sflag [#allocation4], 1
    %496 = vsyncpa %s495, 1

</llo_original>
